<compile_context>
chip_gen: v7x
topology: tpu7x:2x2x1
jax: 0.10.0
libtpu: 0.0.40
codegen_flags: <defaults>
</compile_context>

<pallas_src>
import jax
import jax.numpy as jnp
from jax.experimental import pallas as pl
from jax.experimental.pallas import tpu as pltpu

_LANE = 1024    # lane-dense last dim (multiple of 128)
_TM_MAX = 256   # row-tile; (256, 1024) f32 = 1 MiB / buffer


def _make_prox_kernel(a: float, b: float):
    def kernel(xk_ref, f_ref, out_ref):
        xv = xk_ref[...].astype(jnp.float32)
        fv = f_ref[...].astype(jnp.float32)
        out_ref[...] = (a * fv + b * xv).astype(out_ref.dtype)
    return kernel


def prox_l2(xk, f, tau=0.1):
    """Elementwise prox operator for ||x - f||_2^2 with step tau.

    xk, f: same shape/dtype (e.g. NCHW). Returns same shape/dtype.
    Computes (tau * f + xk) / (1 + tau) as a*f + b*xk with
    a = tau/(1+tau), b = 1/(1+tau) (coefficients in float64 Python, applied
    in f32 inside the kernel).
    """
    assert xk.shape == f.shape and xk.dtype == f.dtype
    orig_shape = xk.shape
    total = int(xk.size)

    a = float(tau) / (1.0 + float(tau))
    b = 1.0 / (1.0 + float(tau))

    # --- lane-dense flatten (+ pad) -------------------------------------
    lane = _LANE if total >= _LANE else 128
    xf = xk.reshape(-1)
    ff = f.reshape(-1)

    pad_tail = (-total) % lane
    if pad_tail:
        xf = jnp.pad(xf, (0, pad_tail))
        ff = jnp.pad(ff, (0, pad_tail))
    rows = (total + pad_tail) // lane

    # --- row tiling ------------------------------------------------------
    if rows <= _TM_MAX:
        tm = rows  # single row-block: block dim equals full array dim -> legal
    else:
        tm = _TM_MAX
        pad_rows = (-rows) % tm
        if pad_rows:
            xf = jnp.pad(xf, (0, pad_rows * lane))
            ff = jnp.pad(ff, (0, pad_rows * lane))
            rows += pad_rows

    x2 = xf.reshape(rows, lane)
    f2 = ff.reshape(rows, lane)
    grid_rows = rows // tm

    out2 = pl.pallas_call(
        _make_prox_kernel(a, b),
        out_shape=jax.ShapeDtypeStruct((rows, lane), xk.dtype),
        grid=(grid_rows,),
        in_specs=[
            pl.BlockSpec((tm, lane), lambda i: (i, 0)),  # xk
            pl.BlockSpec((tm, lane), lambda i: (i, 0)),  # f
        ],
        out_specs=pl.BlockSpec((tm, lane), lambda i: (i, 0)),
        compiler_params=pltpu.CompilerParams(
            dimension_semantics=("parallel",),
        ),
    )(x2, f2)

    out_flat = out2.reshape(-1)
    if out_flat.shape[0] != total:
        out_flat = out_flat[:total]
    return out_flat.reshape(orig_shape)


if __name__ == "__main__":
    key = jax.random.PRNGKey(0)
    k1, k2 = jax.random.split(key)
    # Small NCHW shapes consistent with typical usage of this module.
    xk = jax.random.normal(k1, (2, 4, 16, 16), dtype=jnp.float32)
    f = jax.random.normal(k2, (2, 4, 16, 16), dtype=jnp.float32)
    tau = 0.1

    out = prox_l2(xk, f, tau=tau)
    out = jax.block_until_ready(out)

    # Reference check against plain JAX (same math as the PyTorch forward).
    ref = (tau * f + xk) / (1.0 + tau)
    assert out.shape == xk.shape and out.dtype == xk.dtype
    assert jnp.allclose(out, ref, atol=1e-5, rtol=1e-5)

    # Also exercise a larger, non-divisible shape to cover the padded /
    # multi-block grid path.
    k3, k4 = jax.random.split(k2)
    xb = jax.random.normal(k3, (3, 5, 33, 47), dtype=jnp.float32)
    fb = jax.random.normal(k4, (3, 5, 33, 47), dtype=jnp.float32)
    outb = jax.block_until_ready(prox_l2(xb, fb, tau=tau))
    refb = (tau * fb + xb) / (1.0 + tau)
    assert jnp.allclose(outb, refb, atol=1e-5, rtol=1e-5)

    print("KERNEL_OK")
</pallas_src>

<mosaic_0001>
module attributes {stable_mosaic.version = 11 : i64} {
  func.func @kernel(%arg0: i32, %arg1: memref<2x1024xf32, #tpu.memory_space<vmem>>, %arg2: memref<2x1024xf32, #tpu.memory_space<vmem>>, %arg3: memref<2x1024xf32, #tpu.memory_space<vmem>>) attributes {dimension_semantics = [#tpu.dimension_semantics<parallel>], iteration_bounds = array<i64: 1>, scalar_prefetch = 0 : i64, scratch_operands = 0 : i64, tpu.core_type = #tpu.core_type<tc>, window_params = [{transform_indices = @transform_0, window_bounds = array<i64: 2, 1024>}, {transform_indices = @transform_1, window_bounds = array<i64: 2, 1024>}, {transform_indices = @transform_2, window_bounds = array<i64: 2, 1024>}]} {
    %c0 = arith.constant 0 : index
    %c0_0 = arith.constant 0 : index
    %0 = vector.load %arg1[%c0, %c0_0] : memref<2x1024xf32, #tpu.memory_space<vmem>>, vector<2x1024xf32>
    %c0_1 = arith.constant 0 : index
    %c0_2 = arith.constant 0 : index
    %1 = vector.load %arg2[%c0_1, %c0_2] : memref<2x1024xf32, #tpu.memory_space<vmem>>, vector<2x1024xf32>
    %cst = arith.constant 0.0909090936 : f32
    %2 = vector.broadcast %cst : f32 to vector<2x1024xf32>
    %3 = arith.mulf %2, %1 : vector<2x1024xf32>
    %cst_3 = arith.constant 0.909090936 : f32
    %4 = vector.broadcast %cst_3 : f32 to vector<2x1024xf32>
    %5 = arith.mulf %4, %0 : vector<2x1024xf32>
    %6 = arith.addf %3, %5 : vector<2x1024xf32>
    %c0_4 = arith.constant 0 : index
    %c0_5 = arith.constant 0 : index
    %7 = vector.load %arg3[%c0_4, %c0_5] : memref<2x1024xf32, #tpu.memory_space<vmem>>, vector<2x1024xf32>
    tpu.vector_store %arg3[%c0_4, %c0_5], %6 {strides = array<i32>} : memref<2x1024xf32, #tpu.memory_space<vmem>>, vector<2x1024xf32>,
    return
  }
  func.func @transform_0(%arg0: i32) -> (i32, i32) {
    %c0_i32 = arith.constant 0 : i32
    %c0_i32_0 = arith.constant 0 : i32
    return %arg0, %c0_i32 : i32, i32
  }
  func.func @transform_1(%arg0: i32) -> (i32, i32) {
    %c0_i32 = arith.constant 0 : i32
    %c0_i32_0 = arith.constant 0 : i32
    return %arg0, %c0_i32 : i32, i32
  }
  func.func @transform_2(%arg0: i32) -> (i32, i32) {
    %c0_i32 = arith.constant 0 : i32
    %c0_i32_0 = arith.constant 0 : i32
    return %arg0, %c0_i32 : i32, i32
  }
}

</mosaic_0001>

<llo_original>
// kernel: tpu_custom_call.1
$region0: #{tpu_custom_call.1}
  #allocation0 [shape = 'u32[]', space=smem, size = 0x4, offset = 0x4, fixed_abs, tag = 'smem constant byte address 0x4 - core index']
  #allocation1 [shape = 'u32[144,128]{1,0:T(1,128)}', space=vmem, size = 0x12000, scoped, tag = 'internal scratch']
  %s0 = inlined_call_operand.hbm [shape: f32[2,1024], index: 0, kind: input, shape index: {}]
  %s1 = inlined_call_operand.hbm [shape: f32[2,1024], index: 1, kind: input, shape index: {}]
  %s2 = inlined_call_operand.hbm [shape: f32[2,1024], index: 2, kind: output, shape index: {}]
  %s3 = sld [smem:[#allocation0]]
  $region26: #{tpu_custom_call.1} parent=0
    _
  %s5 = ssub.s32 1, %s3
  %s6 = scalar_select 0, %s5, %s3
  $region1: #{tpu_custom_call.1} parent=0
    #allocation2 [shape = 'u8[8192]{0}', space=vmem, size = 0x2000, scoped, tag = 'input window, operand 0, single buffered']
    #allocation3 [shape = 's32[1]{0}', space=sflag, size = 0x4, scoped, tag = 'scoped memory for tpu_custom_call.1']
    #allocation4 [shape = 's32[1]{0}', space=sflag, size = 0x4, scoped, tag = 'scoped memory for tpu_custom_call.1']
    #allocation5 [shape = 'u8[8192]{0}', space=vmem, size = 0x2000, scoped, tag = 'input window, operand 1, single buffered']
    #allocation6 [shape = 's32[1]{0}', space=sflag, size = 0x4, scoped, tag = 'scoped memory for tpu_custom_call.1']
    #allocation7 [shape = 'u8[8192]{0}', space=vmem, size = 0x2000, scoped, tag = 'output window, operand 0, single buffered']
    %7 = vsyncpa [#allocation3], 0
    %8 = vsyncpa [#allocation6], 0
    %9 = vsyncpa [#allocation4], 0
    // Predicated region
    $region2: #{tpu_custom_call.1} parent=1 // pred_check
      _
    $region3: #{tpu_custom_call.1} parent=1 // pred_check_branch
      %11 = sbr.rel (0) target = $region5
    $region4: #{tpu_custom_call.1} parent=1 // pred_region
      %s13 = ssub.s32 256, 256
      %14 = vsyncadd [#allocation3], %s13
      %s16 = sshll.u32 [#allocation2], 4
      %s17 = int_to_ptr.vmem [resolvable:$true] %s16
      %19 = dma.hbm_to_vmem [thread:$0]  %s0, 256, %s17, [#allocation3]
    $region5: #{tpu_custom_call.1} parent=1 // pred_fallthru
      _
    // Predicated region
    $region6: #{tpu_custom_call.1} parent=1 // pred_check
      _
    $region7: #{tpu_custom_call.1} parent=1 // pred_check_branch
      %21 = sbr.rel (0) target = $region9
    $region8: #{tpu_custom_call.1} parent=1 // pred_region
      %s23 = ssub.s32 256, 256
      %24 = vsyncadd [#allocation6], %s23
      %s26 = sshll.u32 [#allocation5], 4
      %s27 = int_to_ptr.vmem [resolvable:$true] %s26
      %29 = dma.hbm_to_vmem [thread:$0]  %s1, 256, %s27, [#allocation6]
    $region9: #{tpu_custom_call.1} parent=1 // pred_fallthru
      _
    // Predicated region
    $region10: #{tpu_custom_call.1} parent=1 // pred_check
      _
    $region11: #{tpu_custom_call.1} parent=1 // pred_check_branch
      %31 = sbr.rel (0) target = $region13
    $region12: #{tpu_custom_call.1} parent=1 // pred_region
      %32 = dma.done [#allocation3], 256
    $region13: #{tpu_custom_call.1} parent=1 // pred_fallthru
      _
    // Predicated region
    $region14: #{tpu_custom_call.1} parent=1 // pred_check
      _
    $region15: #{tpu_custom_call.1} parent=1 // pred_check_branch
      %34 = sbr.rel (0) target = $region17
    $region16: #{tpu_custom_call.1} parent=1 // pred_region
      %35 = dma.done [#allocation6], 256
    $region17: #{tpu_custom_call.1} parent=1 // pred_fallthru
      _
    %v36 = vld [vmem:[#allocation2] sm:$0xff]
    %v37 = vld [vmem:[#allocation2 + $0x8] sm:$0xff]
    %v38 = vld [vmem:[#allocation5] sm:$0xff]
    %v39 = vld [vmem:[#allocation5 + $0x8] sm:$0xff]
    %v40 = vmul.f32 %v38, 0.09090909
    %v41 = vmul.f32 %v39, 0.09090909
    %v42 = vmul.f32 %v36, 0.90909094
    %v43 = vmul.f32 %v37, 0.90909094
    %v44 = vadd.f32 %v40, %v42
    %v45 = vadd.f32 %v41, %v43
    %46 = vst [vmem:[#allocation7] sm:$0xff] %v44
    %47 = vst [vmem:[#allocation7 + $0x8] sm:$0xff] %v45
    // Predicated region
    $region18: #{tpu_custom_call.1} parent=1 // pred_check
      _
    $region19: #{tpu_custom_call.1} parent=1 // pred_check_branch
      %49 = sbr.rel (0) target = $region21
    $region20: #{tpu_custom_call.1} parent=1 // pred_region
      %s51 = ssub.s32 256, 256
      %52 = vsyncadd [#allocation4], %s51
      %s54 = sshll.u32 [#allocation7], 4
      %s55 = int_to_ptr.vmem [resolvable:$true] %s54
      %57 = dma.vmem_to_hbm [thread:$0]  %s55, 256, %s2, [#allocation4]
    $region21: #{tpu_custom_call.1} parent=1 // pred_fallthru
      _
    // Predicated region
    $region22: #{tpu_custom_call.1} parent=1 // pred_check
      _
    $region23: #{tpu_custom_call.1} parent=1 // pred_check_branch
      %59 = sbr.rel (0) target = $region25
    $region24: #{tpu_custom_call.1} parent=1 // pred_region
      %60 = dma.done [#allocation4], 256
    $region25: #{tpu_custom_call.1} parent=1 // pred_fallthru
      _
    %61 = vsyncpa [#allocation3], 1
    %62 = vsyncpa [#allocation6], 1
    %63 = vsyncpa [#allocation4], 1

</llo_original>
